<compile_context>
chip_gen: v7x
topology: tpu7x:2x2x1
jax: 0.10.0
libtpu: 0.0.40
codegen_flags: <defaults>
</compile_context>

<pallas_src>
import functools

import jax
import jax.numpy as jnp
from jax.experimental import pallas as pl
from jax.experimental.pallas import tpu as pltpu


D_IN, D_H1, D_H2, D_OUT = 36, 64, 32, 16


def _triplet_kernel(x_ref, w1_ref, b1_ref, w2_ref, b2_ref, w3_ref, b3_ref, o_ref):
    # Layer 1: sigmoid(x @ W1 + b1)   (bf16 MXU operands, f32 accumulation)
    x = x_ref[...].astype(jnp.bfloat16)
    h1 = jnp.dot(x, w1_ref[...], preferred_element_type=jnp.float32)
    h1 = jax.nn.sigmoid(h1 + b1_ref[...])                 # f32 VPU/EUP math
    # Layer 2: sigmoid(h1 @ W2 + b2)
    h2 = jnp.dot(h1.astype(jnp.bfloat16), w2_ref[...],
                 preferred_element_type=jnp.float32)
    h2 = jax.nn.sigmoid(h2 + b2_ref[...])
    # Layer 3: linear (no activation)
    out = jnp.dot(h2.astype(jnp.bfloat16), w3_ref[...],
                  preferred_element_type=jnp.float32)
    o_ref[...] = (out + b3_ref[...]).astype(o_ref.dtype)


def _round_up(n, m):
    return ((n + m - 1) // m) * m


@functools.partial(jax.jit, static_argnames=("block_b",))
def triplet_forward(x, w1, b1, w2, b2, w3, b3, *, block_b=2048):
    """x: (B, 36) f32. Weights stored (in, out); biases (1, out)."""
    B = x.shape[0]

    # Batch tile: as large as requested, but no larger than the (sublane-
    # rounded) batch so small batches don't pad to a huge tile.  Must be a
    # multiple of 8 (sublane) to satisfy the BlockSpec constraint.
    block = min(block_b, _round_up(B, 8))
    block = _round_up(max(block, 8), 8)
    n_blk = pl.cdiv(B, block)
    B_pad = n_blk * block
    if B_pad != B:
        x = jnp.pad(x, ((0, B_pad - B), (0, 0)))

    # bf16 MXU operands (weights total ~20 KB); biases kept f32.
    w1b, w2b, w3b = (w.astype(jnp.bfloat16) for w in (w1, w2, w3))
    b1f, b2f, b3f = (b.astype(jnp.float32) for b in (b1, b2, b3))

    # Constant index_map => weights/biases stay resident across the grid.
    full = lambda shape: pl.BlockSpec(shape, lambda i: (0,) * len(shape))

    out = pl.pallas_call(
        _triplet_kernel,
        out_shape=jax.ShapeDtypeStruct((B_pad, D_OUT), x.dtype),
        grid_spec=pltpu.PrefetchScalarGridSpec(
            num_scalar_prefetch=0,
            grid=(n_blk,),
            in_specs=[
                pl.BlockSpec((block, D_IN), lambda i: (i, 0)),  # x tile
                full((D_IN, D_H1)), full((1, D_H1)),            # W1, b1
                full((D_H1, D_H2)), full((1, D_H2)),            # W2, b2
                full((D_H2, D_OUT)), full((1, D_OUT)),          # W3, b3
            ],
            out_specs=pl.BlockSpec((block, D_OUT), lambda i: (i, 0)),
        ),
        compiler_params=pltpu.CompilerParams(
            dimension_semantics=("parallel",),
        ),
    )(x, w1b, b1f, w2b, b2f, w3b, b3f)

    return out[:B] if B_pad != B else out


def init_params(key):
    """Deterministic init mirroring nn.Linear default: U(-1/sqrt(fan_in), +1/sqrt(fan_in))."""
    def linear(key, fan_in, fan_out):
        kw, kb = jax.random.split(key)
        bound = 1.0 / jnp.sqrt(jnp.float32(fan_in))
        w = jax.random.uniform(kw, (fan_in, fan_out), jnp.float32, -bound, bound)
        b = jax.random.uniform(kb, (1, fan_out), jnp.float32, -bound, bound)
        return w, b

    k1, k2, k3 = jax.random.split(key, 3)
    w1, b1 = linear(k1, D_IN, D_H1)
    w2, b2 = linear(k2, D_H1, D_H2)
    w3, b3 = linear(k3, D_H2, D_OUT)
    return w1, b1, w2, b2, w3, b3


def reference_forward(x, w1, b1, w2, b2, w3, b3):
    h1 = jax.nn.sigmoid(x @ w1 + b1)
    h2 = jax.nn.sigmoid(h1 @ w2 + b2)
    return h2 @ w3 + b3


if __name__ == "__main__":
    key = jax.random.PRNGKey(0)
    kx, kp = jax.random.split(key)
    params = init_params(kp)

    # Small batch that is NOT a multiple of 8: exercises the pad + slice path.
    B = 20
    x = jax.random.normal(kx, (B, D_IN), jnp.float32)
    out = jax.block_until_ready(triplet_forward(x, *params))
    ref = reference_forward(x, *params)
    assert out.shape == (B, D_OUT)
    # bf16 MXU operands => small deviation from the pure-f32 reference.
    assert jnp.allclose(out, ref, atol=3e-2, rtol=3e-2), "mismatch vs reference (small batch)"

    # Multi-step grid (grid=4) with a small tile, still small/fast.
    B2 = 256
    x2 = jax.random.normal(kx, (B2, D_IN), jnp.float32)
    out2 = jax.block_until_ready(triplet_forward(x2, *params, block_b=64))
    ref2 = reference_forward(x2, *params)
    assert out2.shape == (B2, D_OUT)
    assert jnp.allclose(out2, ref2, atol=3e-2, rtol=3e-2), "mismatch vs reference (multi-block)"

    print("KERNEL_OK")
</pallas_src>

<mosaic_0001>
module attributes {stable_mosaic.version = 11 : i64} {
  func.func @_triplet_kernel(%arg0: i32, %arg1: memref<24x36xf32, #tpu.memory_space<vmem>>, %arg2: memref<36x64xbf16, #tpu.memory_space<vmem>>, %arg3: memref<1x64xf32, #tpu.memory_space<vmem>>, %arg4: memref<64x32xbf16, #tpu.memory_space<vmem>>, %arg5: memref<1x32xf32, #tpu.memory_space<vmem>>, %arg6: memref<32x16xbf16, #tpu.memory_space<vmem>>, %arg7: memref<1x16xf32, #tpu.memory_space<vmem>>, %arg8: memref<24x16xf32, #tpu.memory_space<vmem>>) attributes {dimension_semantics = [#tpu.dimension_semantics<parallel>], iteration_bounds = array<i64: 1>, scalar_prefetch = 0 : i64, scratch_operands = 0 : i64, tpu.core_type = #tpu.core_type<tc>, window_params = [{transform_indices = @transform_0, window_bounds = array<i64: 24, 36>}, {pipeline_mode = #tpu.pipeline_mode<synchronous>, transform_indices = @transform_1, window_bounds = array<i64: 36, 64>}, {pipeline_mode = #tpu.pipeline_mode<synchronous>, transform_indices = @transform_2, window_bounds = array<i64: 1, 64>}, {pipeline_mode = #tpu.pipeline_mode<synchronous>, transform_indices = @transform_3, window_bounds = array<i64: 64, 32>}, {pipeline_mode = #tpu.pipeline_mode<synchronous>, transform_indices = @transform_4, window_bounds = array<i64: 1, 32>}, {pipeline_mode = #tpu.pipeline_mode<synchronous>, transform_indices = @transform_5, window_bounds = array<i64: 32, 16>}, {pipeline_mode = #tpu.pipeline_mode<synchronous>, transform_indices = @transform_6, window_bounds = array<i64: 1, 16>}, {transform_indices = @transform_7, window_bounds = array<i64: 24, 16>}]} {
    %c0 = arith.constant 0 : index
    %c0_0 = arith.constant 0 : index
    %0 = vector.load %arg1[%c0, %c0_0] : memref<24x36xf32, #tpu.memory_space<vmem>>, vector<24x36xf32>
    %1 = arith.truncf %0 : vector<24x36xf32> to vector<24x36xbf16>
    %c0_1 = arith.constant 0 : index
    %c0_2 = arith.constant 0 : index
    %2 = vector.load %arg2[%c0_1, %c0_2] : memref<36x64xbf16, #tpu.memory_space<vmem>>, vector<36x64xbf16>
    %cst = arith.constant dense<0.000000e+00> : vector<24x64xf32>
    %3 = tpu.matmul %1, %2, %cst {dimension_numbers = #tpu.dot_dimension_numbers<[1], [0], [0], [1], [0, 0, 1, 1], [], []>} : vector<24x36xbf16>, vector<36x64xbf16>, vector<24x64xf32> -> vector<24x64xf32>
    %c0_3 = arith.constant 0 : index
    %c0_4 = arith.constant 0 : index
    %4 = vector.load %arg3[%c0_3, %c0_4] : memref<1x64xf32, #tpu.memory_space<vmem>>, vector<1x64xf32>
    %5 = vector.broadcast %4 : vector<1x64xf32> to vector<24x64xf32>
    %6 = arith.addf %3, %5 : vector<24x64xf32>
    %7 = arith.negf %6 : vector<24x64xf32>
    %8 = math.exp %7 : vector<24x64xf32>
    %cst_5 = arith.constant 1.000000e+00 : f32
    %9 = vector.broadcast %cst_5 : f32 to vector<24x64xf32>
    %10 = arith.addf %9, %8 : vector<24x64xf32>
    %11 = arith.divf %9, %10 : vector<24x64xf32>
    %12 = arith.truncf %11 : vector<24x64xf32> to vector<24x64xbf16>
    %c0_6 = arith.constant 0 : index
    %c0_7 = arith.constant 0 : index
    %13 = vector.load %arg4[%c0_6, %c0_7] : memref<64x32xbf16, #tpu.memory_space<vmem>>, vector<64x32xbf16>
    %cst_8 = arith.constant dense<0.000000e+00> : vector<24x32xf32>
    %14 = tpu.matmul %12, %13, %cst_8 {dimension_numbers = #tpu.dot_dimension_numbers<[1], [0], [0], [1], [0, 0, 1, 1], [], []>} : vector<24x64xbf16>, vector<64x32xbf16>, vector<24x32xf32> -> vector<24x32xf32>
    %c0_9 = arith.constant 0 : index
    %c0_10 = arith.constant 0 : index
    %15 = vector.load %arg5[%c0_9, %c0_10] : memref<1x32xf32, #tpu.memory_space<vmem>>, vector<1x32xf32>
    %16 = vector.broadcast %15 : vector<1x32xf32> to vector<24x32xf32>
    %17 = arith.addf %14, %16 : vector<24x32xf32>
    %18 = arith.negf %17 : vector<24x32xf32>
    %19 = math.exp %18 : vector<24x32xf32>
    %cst_11 = arith.constant 1.000000e+00 : f32
    %20 = vector.broadcast %cst_11 : f32 to vector<24x32xf32>
    %21 = arith.addf %20, %19 : vector<24x32xf32>
    %22 = arith.divf %20, %21 : vector<24x32xf32>
    %23 = arith.truncf %22 : vector<24x32xf32> to vector<24x32xbf16>
    %c0_12 = arith.constant 0 : index
    %c0_13 = arith.constant 0 : index
    %24 = vector.load %arg6[%c0_12, %c0_13] : memref<32x16xbf16, #tpu.memory_space<vmem>>, vector<32x16xbf16>
    %cst_14 = arith.constant dense<0.000000e+00> : vector<24x16xf32>
    %25 = tpu.matmul %23, %24, %cst_14 {dimension_numbers = #tpu.dot_dimension_numbers<[1], [0], [0], [1], [0, 0, 1, 1], [], []>} : vector<24x32xbf16>, vector<32x16xbf16>, vector<24x16xf32> -> vector<24x16xf32>
    %c0_15 = arith.constant 0 : index
    %c0_16 = arith.constant 0 : index
    %26 = vector.load %arg7[%c0_15, %c0_16] : memref<1x16xf32, #tpu.memory_space<vmem>>, vector<1x16xf32>
    %27 = vector.broadcast %26 : vector<1x16xf32> to vector<24x16xf32>
    %28 = arith.addf %25, %27 : vector<24x16xf32>
    %c0_17 = arith.constant 0 : index
    %c0_18 = arith.constant 0 : index
    %29 = vector.load %arg8[%c0_17, %c0_18] : memref<24x16xf32, #tpu.memory_space<vmem>>, vector<24x16xf32>
    tpu.vector_store %arg8[%c0_17, %c0_18], %28 {strides = array<i32>} : memref<24x16xf32, #tpu.memory_space<vmem>>, vector<24x16xf32>,
    return
  }
  func.func @transform_0(%arg0: i32) -> (i32, i32) {
    %c0_i32 = arith.constant 0 : i32
    %c0_i32_0 = arith.constant 0 : i32
    return %arg0, %c0_i32 : i32, i32
  }
  func.func @transform_1(%arg0: i32) -> (i32, i32) {
    %c0_i32 = arith.constant 0 : i32
    %c0_i32_0 = arith.constant 0 : i32
    %c0_i32_1 = arith.constant 0 : i32
    return %c0_i32, %c0_i32_0 : i32, i32
  }
  func.func @transform_2(%arg0: i32) -> (i32, i32) {
    %c0_i32 = arith.constant 0 : i32
    %c0_i32_0 = arith.constant 0 : i32
    %c0_i32_1 = arith.constant 0 : i32
    return %c0_i32, %c0_i32_0 : i32, i32
  }
  func.func @transform_3(%arg0: i32) -> (i32, i32) {
    %c0_i32 = arith.constant 0 : i32
    %c0_i32_0 = arith.constant 0 : i32
    %c0_i32_1 = arith.constant 0 : i32
    return %c0_i32, %c0_i32_0 : i32, i32
  }
  func.func @transform_4(%arg0: i32) -> (i32, i32) {
    %c0_i32 = arith.constant 0 : i32
    %c0_i32_0 = arith.constant 0 : i32
    %c0_i32_1 = arith.constant 0 : i32
    return %c0_i32, %c0_i32_0 : i32, i32
  }
  func.func @transform_5(%arg0: i32) -> (i32, i32) {
    %c0_i32 = arith.constant 0 : i32
    %c0_i32_0 = arith.constant 0 : i32
    %c0_i32_1 = arith.constant 0 : i32
    return %c0_i32, %c0_i32_0 : i32, i32
  }
  func.func @transform_6(%arg0: i32) -> (i32, i32) {
    %c0_i32 = arith.constant 0 : i32
    %c0_i32_0 = arith.constant 0 : i32
    %c0_i32_1 = arith.constant 0 : i32
    return %c0_i32, %c0_i32_0 : i32, i32
  }
  func.func @transform_7(%arg0: i32) -> (i32, i32) {
    %c0_i32 = arith.constant 0 : i32
    %c0_i32_0 = arith.constant 0 : i32
    return %arg0, %c0_i32 : i32, i32
  }
}

</mosaic_0001>

<llo_original>
// kernel: triplet_forward.1
$region0: #{triplet_forward.1}
  #allocation0 [shape = 'u32[]', space=smem, size = 0x4, offset = 0x4, fixed_abs, tag = 'smem constant byte address 0x4 - core index']
  #allocation1 [shape = 'u32[144,128]{1,0:T(1,128)}', space=vmem, size = 0x12000, scoped, tag = 'internal scratch']
  %s0 = inlined_call_operand.vmem [shape: f32[24,36], index: 0, kind: input, shape index: {}]
  %s1 = inlined_call_operand.vmem [shape: bf16[36,64], index: 1, kind: input, shape index: {}]
  %s2 = inlined_call_operand.vmem [shape: f32[1,64], index: 2, kind: input, shape index: {}]
  %s3 = inlined_call_operand.vmem [shape: bf16[64,32], index: 3, kind: input, shape index: {}]
  %s4 = inlined_call_operand.vmem [shape: f32[1,32], index: 4, kind: input, shape index: {}]
  %s5 = inlined_call_operand.vmem [shape: bf16[32,16], index: 5, kind: input, shape index: {}]
  %s6 = inlined_call_operand.vmem [shape: f32[1,16], index: 6, kind: input, shape index: {}]
  %s7 = inlined_call_operand.vmem [shape: f32[24,16], index: 7, kind: output, shape index: {}]
  %s8 = sld [smem:[#allocation0]]
  $region38: #{triplet_forward.1} parent=0
    _
  %s10 = ssub.s32 1, %s8
  %s11 = scalar_select 0, %s10, %s8
  // Predicated region
  $region2: #{triplet_forward.1} parent=0 // pred_check
    _
  $region3: #{triplet_forward.1} parent=0 // pred_check_branch
    %13 = sbr.rel (0) target = $region5
  $region4: #{triplet_forward.1} parent=0 // pred_region
    _
  $region5: #{triplet_forward.1} parent=0 // pred_fallthru
    _
  // Predicated region
  $region6: #{triplet_forward.1} parent=0 // pred_check
    _
  $region7: #{triplet_forward.1} parent=0 // pred_check_branch
    %15 = sbr.rel (0) target = $region9
  $region8: #{triplet_forward.1} parent=0 // pred_region
    _
  $region9: #{triplet_forward.1} parent=0 // pred_fallthru
    _
  // Predicated region
  $region10: #{triplet_forward.1} parent=0 // pred_check
    _
  $region11: #{triplet_forward.1} parent=0 // pred_check_branch
    %17 = sbr.rel (0) target = $region13
  $region12: #{triplet_forward.1} parent=0 // pred_region
    _
  $region13: #{triplet_forward.1} parent=0 // pred_fallthru
    _
  // Predicated region
  $region14: #{triplet_forward.1} parent=0 // pred_check
    _
  $region15: #{triplet_forward.1} parent=0 // pred_check_branch
    %19 = sbr.rel (0) target = $region17
  $region16: #{triplet_forward.1} parent=0 // pred_region
    _
  $region17: #{triplet_forward.1} parent=0 // pred_fallthru
    _
  // Predicated region
  $region18: #{triplet_forward.1} parent=0 // pred_check
    _
  $region19: #{triplet_forward.1} parent=0 // pred_check_branch
    %21 = sbr.rel (0) target = $region21
  $region20: #{triplet_forward.1} parent=0 // pred_region
    _
  $region21: #{triplet_forward.1} parent=0 // pred_fallthru
    _
  // Predicated region
  $region22: #{triplet_forward.1} parent=0 // pred_check
    _
  $region23: #{triplet_forward.1} parent=0 // pred_check_branch
    %23 = sbr.rel (0) target = $region25
  $region24: #{triplet_forward.1} parent=0 // pred_region
    _
  $region25: #{triplet_forward.1} parent=0 // pred_fallthru
    _
  // Predicated region
  $region26: #{triplet_forward.1} parent=0 // pred_check
    _
  $region27: #{triplet_forward.1} parent=0 // pred_check_branch
    %25 = sbr.rel (0) target = $region29
  $region28: #{triplet_forward.1} parent=0 // pred_region
    _
  $region29: #{triplet_forward.1} parent=0 // pred_fallthru
    _
  %v27 = vld [vmem:[%s0] sm:$0xff]
  %v28 = vld [vmem:[%s0 + $0x8] sm:$0xff]
  %v29 = vld [vmem:[%s0 + $0x10] sm:$0xff]
  %v30 = vpack.c.bf16 %v28, %v27
  %v31 = vpack.c.bf16 %v29, %v29
  %v32 = vld [vmem:[%s1] sm:$0xf]
  %v33 = vld [vmem:[%s1 + $0x4] sm:$0xf]
  %v34 = vld [vmem:[%s1 + $0x8] sm:$0xf]
  %v35 = vld [vmem:[%s1 + $0xc] sm:$0xf]
  %v36 = vld [vmem:[%s1 + $0x10] sm:$0x3]
  %v37 = vld [vmem:[%s2] sm:$0x1]
  %v39 = vlaneseq
  %v40 = vshrl.u32 %v39, 7
  %v41 = vsub.s32 0, %v40
  %v42 = vrot.slane %v37, %v41
  %v49 = vunpack.c.l.b16 %v32
  %v50 = vunpack.c.l.b16 %v33
  %v51 = vunpack.c.l.b16 %v34
  %v52 = vunpack.c.l.b16 %v35
  %v53 = vunpack.c.l.b16 %v36
  %v54 = vpack.c.b16 %v50, %v49
  %v55 = vpack.c.b16 %v52, %v51
  %v56 = vpack.c.b16 %v53, %v53
  %vm59 = vcmask 293888
  %v61 = vsel %vm59, %v30, 0
  %v64 = vsel %vm59, %v31, 0
  %vm66 = vcmask 1041408
  %v68 = vsel %vm66, %v56, 0
  %70 = vmatprep.subr.bf16.mxu0 0
  %71 = vmatpush1.bf16.msra.mxu0 %v54
  %72 = vmatprep.subr.bf16.mxu0 0
  %73 = vmatpush1.bf16.msra.mxu0 %v55
  %74 = vmatprep.subr.bf16.mxu0 0
  %75 = vmatpush1.bf16.msra.mxu0 %v68
  %76 = vmatprep.subr.bf16.mxu0 0
  %77 = vmatpush1.bf16.msra.mxu0 0
  %78 = vmatprep.subr.bf16.mxu0 0
  %79 = vmatpush1.bf16.msra.mxu0 0
  %80 = vmatprep.subr.bf16.mxu0 0
  %81 = vmatpush1.bf16.msra.mxu0 0
  %82 = vmatprep.subr.bf16.mxu0 0
  %83 = vmatpush1.bf16.msra.mxu0 0
  %84 = vmatprep.subr.bf16.mxu0 0
  %85 = vmatpush1.bf16.msra.mxu0 0
  %86 = vmatprep.subr.bf16.mxu0 0
  %87 = vmatpush1.bf16.msra.mxu0 0
  %88 = vmatprep.subr.bf16.mxu0 0
  %89 = vmatpush1.bf16.msra.mxu0 0
  %90 = vmatprep.subr.bf16.mxu0 0
  %91 = vmatpush1.bf16.msra.mxu0 0
  %92 = vmatprep.subr.bf16.mxu0 0
  %93 = vmatpush1.bf16.msra.mxu0 0
  %94 = vmatprep.subr.bf16.mxu0 0
  %95 = vmatpush1.bf16.msra.mxu0 0
  %96 = vmatprep.subr.bf16.mxu0 0
  %97 = vmatpush1.bf16.msra.mxu0 0
  %98 = vmatprep.subr.bf16.mxu0 0
  %99 = vmatpush1.bf16.msra.mxu0 0
  %100 = vmatprep.subr.bf16.mxu0 0
  %101 = vmatpush1.bf16.msra.mxu0 0
  %102 = vmatprep.mubr.bf16.mxu0 0
  %103 = vmatmul.mubr.bf16.gmra.mrb[0].mxu0 %v61
  %v104 = vpop.f32.mrb[0].mxu0
  %v105 = vadd.f32 %v42, %v104
  %v106 = vpop.f32.mrb[0].mxu0
  %v107 = vpop.f32.mrb[0].mxu0
  %v108 = vadd.f32 %v42, %v107
  %v109 = vpop.f32.mrb[0].mxu0
  %110 = vmatprep.mubr.bf16.mxu0 0
  %111 = vmatmul.mubr.bf16.gmra.mrb[0].mxu0 %v64
  %v112 = vpop.f32.mrb[0].mxu0
  %v113 = vadd.f32 %v42, %v112
  %v114 = vpop.f32.mrb[0].mxu0
  %v115 = vpop.f32.mrb[0].mxu0
  %v116 = vpop.f32.mrb[0].mxu0
  %117 = vdwg.mxu0
  %v118 = vxor.u32 %v105, 2147483648
  %v119 = vxor.u32 %v108, 2147483648
  %v120 = vxor.u32 %v113, 2147483648
  %v121 = vmul.f32 %v118, 1.442695
  %v122 = vpow.pop %v121
  %v123 = vmul.f32 %v119, 1.442695
  %v124 = vpow.pop %v123
  %v125 = vmul.f32 %v120, 1.442695
  %v126 = vpow.pop %v125
  %v127 = vadd.f32 %v122, 1.0
  %v128 = vadd.f32 %v124, 1.0
  %v129 = vadd.f32 %v126, 1.0
  %v130 = vrcp.pop %v127
  %v131 = vmul.f32 1.0, %v130
  %v132 = vrcp.pop %v128
  %v133 = vmul.f32 1.0, %v132
  %v134 = vrcp.pop %v129
  %v135 = vmul.f32 1.0, %v134
  %v136 = vpack.c.bf16 %v133, %v131
  %v137 = vpack.c.bf16 %v135, %v135
  %v138 = vld [vmem:[%s3] sm:$0xf]
  %v139 = vld [vmem:[%s3 + $0x4] sm:$0xf]
  %v140 = vld [vmem:[%s3 + $0x8] sm:$0xf]
  %v141 = vld [vmem:[%s3 + $0xc] sm:$0xf]
  %v142 = vld [vmem:[%s3 + $0x10] sm:$0xf]
  %v143 = vld [vmem:[%s3 + $0x14] sm:$0xf]
  %v144 = vld [vmem:[%s3 + $0x18] sm:$0xf]
  %v145 = vld [vmem:[%s3 + $0x1c] sm:$0xf]
  %v146 = vld [vmem:[%s4] sm:$0x1]
  %v148 = vlaneseq
  %v149 = vshrl.u32 %v148, 7
  %v150 = vsub.s32 0, %v149
  %v151 = vrot.slane %v146, %v150
  %v161 = vunpack.c.l.b16 %v138
  %v162 = vunpack.c.l.b16 %v139
  %v163 = vunpack.c.l.b16 %v140
  %v164 = vunpack.c.l.b16 %v141
  %v165 = vunpack.c.l.b16 %v142
  %v166 = vunpack.c.l.b16 %v143
  %v167 = vunpack.c.l.b16 %v144
  %v168 = vunpack.c.l.b16 %v145
  %v169 = vpack.c.b16 %v162, %v161
  %v170 = vpack.c.b16 %v164, %v163
  %v171 = vpack.c.b16 %v166, %v165
  %v172 = vpack.c.b16 %v168, %v167
  %vm177 = vcmask 523264
  %v179 = vsel %vm177, %v136, 0
  %v182 = vsel %vm177, %v137, 0
  %184 = vmatprep.subr.bf16.mxu0 0
  %185 = vmatpush1.bf16.msra.mxu0 %v169
  %186 = vmatprep.subr.bf16.mxu0 0
  %187 = vmatpush1.bf16.msra.mxu0 %v170
  %188 = vmatprep.subr.bf16.mxu0 0
  %189 = vmatpush1.bf16.msra.mxu0 %v171
  %190 = vmatprep.subr.bf16.mxu0 0
  %191 = vmatpush1.bf16.msra.mxu0 %v172
  %192 = vmatprep.subr.bf16.mxu0 0
  %193 = vmatpush1.bf16.msra.mxu0 0
  %194 = vmatprep.subr.bf16.mxu0 0
  %195 = vmatpush1.bf16.msra.mxu0 0
  %196 = vmatprep.subr.bf16.mxu0 0
  %197 = vmatpush1.bf16.msra.mxu0 0
  %198 = vmatprep.subr.bf16.mxu0 0
  %199 = vmatpush1.bf16.msra.mxu0 0
  %200 = vmatprep.subr.bf16.mxu0 0
  %201 = vmatpush1.bf16.msra.mxu0 0
  %202 = vmatprep.subr.bf16.mxu0 0
  %203 = vmatpush1.bf16.msra.mxu0 0
  %204 = vmatprep.subr.bf16.mxu0 0
  %205 = vmatpush1.bf16.msra.mxu0 0
  %206 = vmatprep.subr.bf16.mxu0 0
  %207 = vmatpush1.bf16.msra.mxu0 0
  %208 = vmatprep.subr.bf16.mxu0 0
  %209 = vmatpush1.bf16.msra.mxu0 0
  %210 = vmatprep.subr.bf16.mxu0 0
  %211 = vmatpush1.bf16.msra.mxu0 0
  %212 = vmatprep.subr.bf16.mxu0 0
  %213 = vmatpush1.bf16.msra.mxu0 0
  %214 = vmatprep.subr.bf16.mxu0 0
  %215 = vmatpush1.bf16.msra.mxu0 0
  %216 = vmatprep.mubr.bf16.mxu0 0
  %217 = vmatmul.mubr.bf16.gmra.mrb[0].mxu0 %v179
  %v218 = vpop.f32.mrb[0].mxu0
  %v219 = vadd.f32 %v151, %v218
  %v220 = vpop.f32.mrb[0].mxu0
  %v221 = vpop.f32.mrb[0].mxu0
  %v222 = vadd.f32 %v151, %v221
  %v223 = vpop.f32.mrb[0].mxu0
  %224 = vmatprep.mubr.bf16.mxu0 0
  %225 = vmatmul.mubr.bf16.gmra.mrb[0].mxu0 %v182
  %v226 = vpop.f32.mrb[0].mxu0
  %v227 = vadd.f32 %v151, %v226
  %v228 = vpop.f32.mrb[0].mxu0
  %v229 = vpop.f32.mrb[0].mxu0
  %v230 = vpop.f32.mrb[0].mxu0
  %231 = vdwg.mxu0
  %v232 = vxor.u32 %v219, 2147483648
  %v233 = vxor.u32 %v222, 2147483648
  %v234 = vxor.u32 %v227, 2147483648
  %v235 = vmul.f32 %v232, 1.442695
  %v236 = vpow.pop %v235
  %v237 = vmul.f32 %v233, 1.442695
  %v238 = vpow.pop %v237
  %v239 = vmul.f32 %v234, 1.442695
  %v240 = vpow.pop %v239
  %v241 = vadd.f32 %v236, 1.0
  %v242 = vadd.f32 %v238, 1.0
  %v243 = vadd.f32 %v240, 1.0
  %v244 = vrcp.pop %v241
  %v245 = vmul.f32 1.0, %v244
  %v246 = vrcp.pop %v242
  %v247 = vmul.f32 1.0, %v246
  %v248 = vrcp.pop %v243
  %v249 = vmul.f32 1.0, %v248
  %v250 = vpack.c.bf16 %v247, %v245
  %v251 = vpack.c.bf16 %v249, %v249
  %v252 = vld [vmem:[%s5] sm:$0xf]
  %v253 = vld [vmem:[%s5 + $0x4] sm:$0xf]
  %v254 = vld [vmem:[%s5 + $0x8] sm:$0xf]
  %v255 = vld [vmem:[%s5 + $0xc] sm:$0xf]
  %v256 = vld [vmem:[%s6] sm:$0x1]
  %v258 = vlaneseq
  %v259 = vshrl.u32 %v258, 7
  %v260 = vsub.s32 0, %v259
  %v261 = vrot.slane %v256, %v260
  %v267 = vunpack.c.l.b16 %v252
  %v268 = vunpack.c.l.b16 %v253
  %v269 = vunpack.c.l.b16 %v254
  %v270 = vunpack.c.l.b16 %v255
  %v271 = vpack.c.b16 %v268, %v267
  %v272 = vpack.c.b16 %v270, %v269
  %vm275 = vcmask 261120
  %v277 = vsel %vm275, %v250, 0
  %v280 = vsel %vm275, %v251, 0
  %282 = vmatprep.subr.bf16.mxu0 0
  %283 = vmatpush1.bf16.msra.mxu0 %v271
  %284 = vmatprep.subr.bf16.mxu0 0
  %285 = vmatpush1.bf16.msra.mxu0 %v272
  %286 = vmatprep.subr.bf16.mxu0 0
  %287 = vmatpush1.bf16.msra.mxu0 0
  %288 = vmatprep.subr.bf16.mxu0 0
  %289 = vmatpush1.bf16.msra.mxu0 0
  %290 = vmatprep.subr.bf16.mxu0 0
  %291 = vmatpush1.bf16.msra.mxu0 0
  %292 = vmatprep.subr.bf16.mxu0 0
  %293 = vmatpush1.bf16.msra.mxu0 0
  %294 = vmatprep.subr.bf16.mxu0 0
  %295 = vmatpush1.bf16.msra.mxu0 0
  %296 = vmatprep.subr.bf16.mxu0 0
  %297 = vmatpush1.bf16.msra.mxu0 0
  %298 = vmatprep.subr.bf16.mxu0 0
  %299 = vmatpush1.bf16.msra.mxu0 0
  %300 = vmatprep.subr.bf16.mxu0 0
  %301 = vmatpush1.bf16.msra.mxu0 0
  %302 = vmatprep.subr.bf16.mxu0 0
  %303 = vmatpush1.bf16.msra.mxu0 0
  %304 = vmatprep.subr.bf16.mxu0 0
  %305 = vmatpush1.bf16.msra.mxu0 0
  %306 = vmatprep.subr.bf16.mxu0 0
  %307 = vmatpush1.bf16.msra.mxu0 0
  %308 = vmatprep.subr.bf16.mxu0 0
  %309 = vmatpush1.bf16.msra.mxu0 0
  %310 = vmatprep.subr.bf16.mxu0 0
  %311 = vmatpush1.bf16.msra.mxu0 0
  %312 = vmatprep.subr.bf16.mxu0 0
  %313 = vmatpush1.bf16.msra.mxu0 0
  %314 = vmatprep.mubr.bf16.mxu0 0
  %315 = vmatmul.mubr.bf16.gmra.mrb[0].mxu0 %v277
  %v316 = vpop.f32.mrb[0].mxu0
  %v317 = vadd.f32 %v261, %v316
  %v318 = vpop.f32.mrb[0].mxu0
  %v319 = vpop.f32.mrb[0].mxu0
  %v320 = vadd.f32 %v261, %v319
  %v321 = vpop.f32.mrb[0].mxu0
  %322 = vmatprep.mubr.bf16.mxu0 0
  %323 = vmatmul.mubr.bf16.gmra.mrb[0].mxu0 %v280
  %v324 = vpop.f32.mrb[0].mxu0
  %v325 = vadd.f32 %v261, %v324
  %v326 = vpop.f32.mrb[0].mxu0
  %v327 = vpop.f32.mrb[0].mxu0
  %v328 = vpop.f32.mrb[0].mxu0
  %329 = vdwg.mxu0
  %vm330 = vcmask 130048
  %331 = vst.msk [vmem:[%s7] sm:$0xff] %vm330, %v317
  %332 = vst.msk [vmem:[%s7 + $0x8] sm:$0xff] %vm330, %v320
  %333 = vst.msk [vmem:[%s7 + $0x10] sm:$0xff] %vm330, %v325
  // Predicated region
  $region30: #{triplet_forward.1} parent=0 // pred_check
    _
  $region31: #{triplet_forward.1} parent=0 // pred_check_branch
    %335 = sbr.rel (0) target = $region33
  $region32: #{triplet_forward.1} parent=0 // pred_region
    _
  $region33: #{triplet_forward.1} parent=0 // pred_fallthru
    _
  // Predicated region
  $region34: #{triplet_forward.1} parent=0 // pred_check
    _
  $region35: #{triplet_forward.1} parent=0 // pred_check_branch
    %337 = sbr.rel (0) target = $region37
  $region36: #{triplet_forward.1} parent=0 // pred_region
    _
  $region37: #{triplet_forward.1} parent=0 // pred_fallthru
    _

</llo_original>
